<compile_context>
chip_gen: v7x
topology: tpu7x:2x2x1
jax: 0.10.0
libtpu: 0.0.40
codegen_flags: <defaults>
</compile_context>

<pallas_src>
import jax
import jax.numpy as jnp
from jax.experimental import pallas as pl
from jax.experimental.pallas import tpu as pltpu

# TODO(synk): 'lp' and 'lse' pool_types are not implemented; this kernel
# reproduces the module default pool_types=['avg', 'max'].

_NEG_INF = float("-inf")


def _vmem_budget_bytes():
    """Generation-aware VMEM budget (v7x: 64 MiB physical, v5e/v6e: 128 MiB)."""
    try:
        cap = int(pltpu.get_tpu_info().vmem_capacity_bytes)
    except Exception:
        cap = 64 << 20                      # conservative (v7x) fallback
    return max(24 << 20, min(int(cap * 0.6), 100 << 20))


def _largest_divisor_leq(n, limit):
    limit = max(1, min(n, limit))
    for d in range(limit, 0, -1):
        if n % d == 0:
            return d
    return 1


def _make_fused_kernel(S):
    """Single pass: spatial sum/max + shared MLP + sigmoid + scale, per batch slab."""
    inv_s = 1.0 / float(S)

    def kernel(w1_ref, b1_ref, w2_ref, b2_ref, x_ref, o_ref):
        xf = x_ref[...].astype(jnp.float32)             # (nb, C, S)
        ssum = jnp.sum(xf, axis=2)                      # (nb, C)
        smax = jnp.max(xf, axis=2)                      # (nb, C)

        w1 = w1_ref[...].astype(jnp.float32)
        b1 = b1_ref[...].astype(jnp.float32)
        w2 = w2_ref[...].astype(jnp.float32)
        b2 = b2_ref[...].astype(jnp.float32)

        def mlp(p):                                     # p: (nb, C)
            h = jnp.dot(p, w1, preferred_element_type=jnp.float32) + b1
            h = jnp.maximum(h, 0.0)
            return jnp.dot(h, w2, preferred_element_type=jnp.float32) + b2

        att = mlp(ssum * inv_s) + mlp(smax)
        gate = 1.0 / (1.0 + jnp.exp(-att))              # (nb, C)
        o_ref[...] = (xf * gate[:, :, None]).astype(o_ref.dtype)

    return kernel


def _make_reduce_kernel(S, ts, grid_s, half, split):
    """Fallback pass 1: streaming spatial reduction -> raw (sum, max) partials."""
    mask_needed = (S % ts != 0) or (grid_s % split != 0)

    def kernel(x_ref, sum_ref, max_ref):
        p = pl.program_id(0)
        s = pl.program_id(1)

        @pl.when(s == 0)
        def _():
            sum_ref[...] = jnp.zeros_like(sum_ref)
            max_ref[...] = jnp.full_like(max_ref, _NEG_INF)

        x = x_ref[...].astype(jnp.float32)              # (1, C, ts)
        if mask_needed:
            tile = (p % split) * half + s               # intended spatial tile
            pos = tile * ts + jax.lax.broadcasted_iota(
                jnp.int32, (1, 1, x.shape[2]), 2)
            valid = pos < S                             # (1, 1, ts)
            x_sum = jnp.where(valid, x, 0.0)
            x_max = jnp.where(valid, x, _NEG_INF)
        else:
            x_sum = x
            x_max = x

        sum_ref[...] += jnp.sum(x_sum, axis=2)          # (1, C)
        max_ref[...] = jnp.maximum(max_ref[...], jnp.max(x_max, axis=2))

    return kernel


def _scale_kernel(gate_ref, x_ref, o_ref):
    """Fallback pass 2: out = x * gate (gate broadcast over flattened spatial)."""
    gate = gate_ref[...].astype(jnp.float32)            # (1, C)
    x = x_ref[...].astype(jnp.float32)                  # (1, C, ts)
    o_ref[...] = (x * gate[:, :, None]).astype(o_ref.dtype)


def channel_gate(x, w1, b1, w2, b2, *, max_block_bytes=None):
    """ChannelGate forward.

    Args:
      x:  (N, C, H, W) input.
      w1: (C, C//r)   first Linear weight, pre-transposed (y = p @ w1 + b1).
      b1: (C//r,)     first Linear bias.
      w2: (C//r, C)   second Linear weight, pre-transposed.
      b2: (C,)        second Linear bias.
      max_block_bytes: optional cap on the per-block byte budget (testing).

    Returns:
      (N, C, H, W) array, same dtype as x.
    """
    N, C, H, W = x.shape
    S = H * W
    Ch = w1.shape[1]
    itemsize = jnp.dtype(x.dtype).itemsize

    vmem_budget = _vmem_budget_bytes()
    # ~1/8 of the budget per block leaves room for double-buffered in+out
    # blocks plus the in-kernel f32 temporaries.
    block_budget = vmem_budget // 8
    if max_block_bytes is not None:
        block_budget = min(block_budget, max_block_bytes)
    # Keep individual pipeline steps in the ~1-4 MiB sweet spot when possible.
    target_block = min(block_budget, 4 << 20)

    x_flat = x.reshape(N, C, S)                          # lane-dense spatial flatten
    b1_2d = b1.reshape(1, Ch)
    b2_2d = b2.reshape(1, C)

    row_bytes = C * S * itemsize

    if row_bytes <= block_budget:
        # ------- fused single-pass path: read x once, write out once -------
        nb = _largest_divisor_leq(N, max(1, target_block // max(1, row_bytes)))
        grid_n = N // nb
        out_flat = pl.pallas_call(
            _make_fused_kernel(S),
            out_shape=jax.ShapeDtypeStruct((N, C, S), x.dtype),
            grid=(grid_n,),
            in_specs=[
                pl.BlockSpec((C, Ch), lambda i: (0, 0)),           # W1
                pl.BlockSpec((1, Ch), lambda i: (0, 0)),           # b1
                pl.BlockSpec((Ch, C), lambda i: (0, 0)),           # W2
                pl.BlockSpec((1, C), lambda i: (0, 0)),            # b2
                pl.BlockSpec((nb, C, S), lambda i: (i, 0, 0)),     # x slab
            ],
            out_specs=pl.BlockSpec((nb, C, S), lambda i: (i, 0, 0)),
            compiler_params=pltpu.CompilerParams(
                dimension_semantics=("parallel",),
                vmem_limit_bytes=vmem_budget),
            cost_estimate=pl.CostEstimate(
                flops=3 * N * C * S + 8 * N * C * Ch,
                transcendentals=N * C,
                bytes_accessed=2 * N * C * S * itemsize),
        )(w1, b1_2d, w2, b2_2d, x_flat)
        return out_flat.reshape(N, C, H, W)

    # ------- fallback 2-pass path (a single (C, S) slab does not fit) -------
    # Spatial tile: multiple of 128 (lane-dense, unmasked vld/vst), sized from
    # the block budget.  No HBM padding; the ragged tail is masked in-kernel
    # (pass 1) / masked on store by Pallas (pass 2).
    ts = max(128, (target_block // (C * itemsize * 128)) * 128)
    ts = min(ts, pl.cdiv(S, 128) * 128)
    grid_s = pl.cdiv(S, ts)
    split = 2 if grid_s >= 2 else 1          # 2-way spatial split so v7x uses
    half = pl.cdiv(grid_s, split)            # both TensorCores even for N == 1

    def x_idx(p, s):
        # Clamp so the DMA never starts fully out of bounds; the in-kernel mask
        # uses the *intended* tile index, so clamped (duplicate) tiles add 0/-inf.
        return (p // split, 0, jnp.minimum((p % split) * half + s, grid_s - 1))

    sum_part, max_part = pl.pallas_call(
        _make_reduce_kernel(S, ts, grid_s, half, split),
        out_shape=(jax.ShapeDtypeStruct((N * split, C), jnp.float32),
                   jax.ShapeDtypeStruct((N * split, C), jnp.float32)),
        grid=(N * split, half),
        in_specs=[pl.BlockSpec((1, C, ts), x_idx)],
        out_specs=(pl.BlockSpec((1, C), lambda p, s: (p, 0)),
                   pl.BlockSpec((1, C), lambda p, s: (p, 0))),
        compiler_params=pltpu.CompilerParams(
            dimension_semantics=("parallel", "arbitrary"),
            vmem_limit_bytes=vmem_budget),
        cost_estimate=pl.CostEstimate(
            flops=2 * N * C * S, transcendentals=0,
            bytes_accessed=N * C * S * itemsize),
    )(x_flat)

    # Tiny shared MLP + sigmoid over all N rows at once: plain XLA is ideal for
    # an (N, C) @ (C, C//r) matmul and keeps the weights out of the pipeline.
    f32 = jnp.float32
    ssum = sum_part.reshape(N, split, C).sum(axis=1)
    smax = max_part.reshape(N, split, C).max(axis=1)

    def mlp(p):
        h = jnp.maximum(p @ w1.astype(f32) + b1.astype(f32), 0.0)
        return h @ w2.astype(f32) + b2.astype(f32)

    gate = jax.nn.sigmoid(mlp(ssum / S) + mlp(smax)).astype(f32)     # (N, C)

    out_flat = pl.pallas_call(
        _scale_kernel,
        out_shape=jax.ShapeDtypeStruct((N, C, S), x.dtype),
        grid=(N, grid_s),
        in_specs=[
            pl.BlockSpec((1, C), lambda n, s: (n, 0)),
            pl.BlockSpec((1, C, ts), lambda n, s: (n, 0, s)),
        ],
        out_specs=pl.BlockSpec((1, C, ts), lambda n, s: (n, 0, s)),
        compiler_params=pltpu.CompilerParams(
            dimension_semantics=("parallel", "parallel"),
            vmem_limit_bytes=vmem_budget),
        cost_estimate=pl.CostEstimate(
            flops=N * C * S, transcendentals=0,
            bytes_accessed=2 * N * C * S * itemsize),
    )(gate, x_flat)

    return out_flat.reshape(N, C, H, W)


def channel_gate_ref(x, w1, b1, w2, b2):
    """Pure-JAX reference matching the PyTorch forward (pool_types=['avg','max'])."""
    xf = x.astype(jnp.float32)
    N, C, H, W = x.shape
    flat = xf.reshape(N, C, H * W)
    avg = jnp.mean(flat, axis=2)
    mx = jnp.max(flat, axis=2)

    def mlp(p):
        return jnp.maximum(p @ w1 + b1, 0.0) @ w2 + b2

    gate = jax.nn.sigmoid(mlp(avg) + mlp(mx))
    return (xf * gate[:, :, None, None]).astype(x.dtype)


def _check(x, w1, b1, w2, b2, **kw):
    out = jax.block_until_ready(channel_gate(x, w1, b1, w2, b2, **kw))
    ref = channel_gate_ref(x, w1, b1, w2, b2)
    assert out.shape == ref.shape and out.dtype == ref.dtype
    assert jnp.allclose(out, ref, rtol=2e-4, atol=2e-4), "mismatch vs reference"


if __name__ == "__main__":
    # ChannelGate(gate_channels=64, reduction_ratio=16) on a small NCHW input.
    N, C, H, W = 2, 64, 16, 16
    reduction_ratio = 16
    Ch = C // reduction_ratio   # hidden dim = 4

    key = jax.random.PRNGKey(0)
    kx, k1, k2, k3, k4, kx2 = jax.random.split(key, 6)
    x = jax.random.normal(kx, (N, C, H, W), dtype=jnp.float32)
    # nn.Linear weights, stored pre-transposed so y = p @ W + b.
    w1 = jax.random.normal(k1, (C, Ch), dtype=jnp.float32) * 0.1
    b1 = jax.random.normal(k2, (Ch,), dtype=jnp.float32) * 0.1
    w2 = jax.random.normal(k3, (Ch, C), dtype=jnp.float32) * 0.1
    b2 = jax.random.normal(k4, (C,), dtype=jnp.float32) * 0.1

    # Primary fused single-pass path.
    _check(x, w1, b1, w2, b2)

    # Force the 2-pass streaming fallback (tiny per-block budget) so the tiled
    # reduction, 2-way split, and scale kernels are exercised too.
    _check(x, w1, b1, w2, b2, max_block_bytes=16 * 1024)

    # Ragged spatial size (S = 15*20 = 300, not a multiple of 128): exercises
    # the in-kernel tail mask and the clamped fully-invalid split tiles.
    x_odd = jax.random.normal(kx2, (N, C, 15, 20), dtype=jnp.float32)
    _check(x_odd, w1, b1, w2, b2, max_block_bytes=16 * 1024)

    print("KERNEL_OK")
</pallas_src>

<mosaic_0001>
module attributes {stable_mosaic.version = 11 : i64} {
  func.func @kernel(%arg0: i32, %arg1: memref<64x4xf32, #tpu.memory_space<vmem>>, %arg2: memref<1x4xf32, #tpu.memory_space<vmem>>, %arg3: memref<4x64xf32, #tpu.memory_space<vmem>>, %arg4: memref<1x64xf32, #tpu.memory_space<vmem>>, %arg5: memref<2x64x256xf32, #tpu.memory_space<vmem>>, %arg6: memref<2x64x256xf32, #tpu.memory_space<vmem>>) attributes {dimension_semantics = [#tpu.dimension_semantics<parallel>], iteration_bounds = array<i64: 1>, scalar_prefetch = 0 : i64, scratch_operands = 0 : i64, tpu.core_type = #tpu.core_type<tc>, window_params = [{pipeline_mode = #tpu.pipeline_mode<synchronous>, transform_indices = @transform_0, window_bounds = array<i64: 64, 4>}, {pipeline_mode = #tpu.pipeline_mode<synchronous>, transform_indices = @transform_1, window_bounds = array<i64: 1, 4>}, {pipeline_mode = #tpu.pipeline_mode<synchronous>, transform_indices = @transform_2, window_bounds = array<i64: 4, 64>}, {pipeline_mode = #tpu.pipeline_mode<synchronous>, transform_indices = @transform_3, window_bounds = array<i64: 1, 64>}, {transform_indices = @transform_4, window_bounds = array<i64: 2, 64, 256>}, {transform_indices = @transform_5, window_bounds = array<i64: 2, 64, 256>}]} {
    %c0 = arith.constant 0 : index
    %c0_0 = arith.constant 0 : index
    %c0_1 = arith.constant 0 : index
    %0 = vector.load %arg5[%c0, %c0_0, %c0_1] : memref<2x64x256xf32, #tpu.memory_space<vmem>>, vector<2x64x256xf32>
    %cst = arith.constant dense<0.000000e+00> : vector<2x64xf32>
    %1 = vector.multi_reduction <add>, %0, %cst [2] : vector<2x64x256xf32> to vector<2x64xf32>
    %cst_2 = arith.constant dense<0xFF800000> : vector<2x64xf32>
    %2 = vector.multi_reduction <maximumf>, %0, %cst_2 [2] : vector<2x64x256xf32> to vector<2x64xf32>
    %c0_3 = arith.constant 0 : index
    %c0_4 = arith.constant 0 : index
    %3 = vector.load %arg1[%c0_3, %c0_4] : memref<64x4xf32, #tpu.memory_space<vmem>>, vector<64x4xf32>
    %c0_5 = arith.constant 0 : index
    %c0_6 = arith.constant 0 : index
    %4 = vector.load %arg2[%c0_5, %c0_6] : memref<1x4xf32, #tpu.memory_space<vmem>>, vector<1x4xf32>
    %c0_7 = arith.constant 0 : index
    %c0_8 = arith.constant 0 : index
    %5 = vector.load %arg3[%c0_7, %c0_8] : memref<4x64xf32, #tpu.memory_space<vmem>>, vector<4x64xf32>
    %c0_9 = arith.constant 0 : index
    %c0_10 = arith.constant 0 : index
    %6 = vector.load %arg4[%c0_9, %c0_10] : memref<1x64xf32, #tpu.memory_space<vmem>>, vector<1x64xf32>
    %cst_11 = arith.constant 3.906250e-03 : f32
    %7 = vector.broadcast %cst_11 : f32 to vector<2x64xf32>
    %8 = arith.mulf %1, %7 : vector<2x64xf32>
    %cst_12 = arith.constant dense<0.000000e+00> : vector<2x4xf32>
    %9 = tpu.matmul %8, %3, %cst_12 {dimension_numbers = #tpu.dot_dimension_numbers<[1], [0], [0], [1], [0, 0, 1, 1], [], []>} : vector<2x64xf32>, vector<64x4xf32>, vector<2x4xf32> -> vector<2x4xf32>
    %10 = vector.broadcast %4 : vector<1x4xf32> to vector<2x4xf32>
    %11 = arith.addf %9, %10 : vector<2x4xf32>
    %cst_13 = arith.constant 0.000000e+00 : f32
    %12 = vector.broadcast %cst_13 : f32 to vector<2x4xf32>
    %13 = arith.maximumf %11, %12 : vector<2x4xf32>
    %cst_14 = arith.constant dense<0.000000e+00> : vector<2x64xf32>
    %14 = tpu.matmul %13, %5, %cst_14 {dimension_numbers = #tpu.dot_dimension_numbers<[1], [0], [0], [1], [0, 0, 1, 1], [], []>} : vector<2x4xf32>, vector<4x64xf32>, vector<2x64xf32> -> vector<2x64xf32>
    %15 = vector.broadcast %6 : vector<1x64xf32> to vector<2x64xf32>
    %16 = arith.addf %14, %15 : vector<2x64xf32>
    %cst_15 = arith.constant dense<0.000000e+00> : vector<2x4xf32>
    %17 = tpu.matmul %2, %3, %cst_15 {dimension_numbers = #tpu.dot_dimension_numbers<[1], [0], [0], [1], [0, 0, 1, 1], [], []>} : vector<2x64xf32>, vector<64x4xf32>, vector<2x4xf32> -> vector<2x4xf32>
    %18 = vector.broadcast %4 : vector<1x4xf32> to vector<2x4xf32>
    %19 = arith.addf %17, %18 : vector<2x4xf32>
    %cst_16 = arith.constant 0.000000e+00 : f32
    %20 = vector.broadcast %cst_16 : f32 to vector<2x4xf32>
    %21 = arith.maximumf %19, %20 : vector<2x4xf32>
    %cst_17 = arith.constant dense<0.000000e+00> : vector<2x64xf32>
    %22 = tpu.matmul %21, %5, %cst_17 {dimension_numbers = #tpu.dot_dimension_numbers<[1], [0], [0], [1], [0, 0, 1, 1], [], []>} : vector<2x4xf32>, vector<4x64xf32>, vector<2x64xf32> -> vector<2x64xf32>
    %23 = vector.broadcast %6 : vector<1x64xf32> to vector<2x64xf32>
    %24 = arith.addf %22, %23 : vector<2x64xf32>
    %25 = arith.addf %16, %24 : vector<2x64xf32>
    %cst_18 = arith.constant 0.000000e+00 : f32
    %26 = vector.broadcast %cst_18 : f32 to vector<2x64xf32>
    %27 = arith.subf %26, %25 : vector<2x64xf32>
    %28 = math.exp %27 : vector<2x64xf32>
    %cst_19 = arith.constant 1.000000e+00 : f32
    %29 = vector.broadcast %cst_19 : f32 to vector<2x64xf32>
    %30 = arith.addf %29, %28 : vector<2x64xf32>
    %cst_20 = arith.constant 1.000000e+00 : f32
    %31 = vector.broadcast %cst_20 : f32 to vector<2x64xf32>
    %32 = arith.divf %31, %30 : vector<2x64xf32>
    %33 = vector.shape_cast %32 : vector<2x64xf32> to vector<2x64x1xf32>
    %34 = vector.broadcast %33 : vector<2x64x1xf32> to vector<2x64x256xf32>
    %35 = arith.mulf %0, %34 : vector<2x64x256xf32>
    %c0_21 = arith.constant 0 : index
    %c0_22 = arith.constant 0 : index
    %c0_23 = arith.constant 0 : index
    %36 = vector.load %arg6[%c0_21, %c0_22, %c0_23] : memref<2x64x256xf32, #tpu.memory_space<vmem>>, vector<2x64x256xf32>
    tpu.vector_store %arg6[%c0_21, %c0_22, %c0_23], %35 {strides = array<i32>} : memref<2x64x256xf32, #tpu.memory_space<vmem>>, vector<2x64x256xf32>,
    return
  }
  func.func @transform_0(%arg0: i32) -> (i32, i32) {
    %c0_i32 = arith.constant 0 : i32
    %c0_i32_0 = arith.constant 0 : i32
    %c0_i32_1 = arith.constant 0 : i32
    return %c0_i32, %c0_i32_0 : i32, i32
  }
  func.func @transform_1(%arg0: i32) -> (i32, i32) {
    %c0_i32 = arith.constant 0 : i32
    %c0_i32_0 = arith.constant 0 : i32
    %c0_i32_1 = arith.constant 0 : i32
    return %c0_i32, %c0_i32_0 : i32, i32
  }
  func.func @transform_2(%arg0: i32) -> (i32, i32) {
    %c0_i32 = arith.constant 0 : i32
    %c0_i32_0 = arith.constant 0 : i32
    %c0_i32_1 = arith.constant 0 : i32
    return %c0_i32, %c0_i32_0 : i32, i32
  }
  func.func @transform_3(%arg0: i32) -> (i32, i32) {
    %c0_i32 = arith.constant 0 : i32
    %c0_i32_0 = arith.constant 0 : i32
    %c0_i32_1 = arith.constant 0 : i32
    return %c0_i32, %c0_i32_0 : i32, i32
  }
  func.func @transform_4(%arg0: i32) -> (i32, i32, i32) {
    %c0_i32 = arith.constant 0 : i32
    %c0_i32_0 = arith.constant 0 : i32
    %c0_i32_1 = arith.constant 0 : i32
    return %arg0, %c0_i32, %c0_i32_0 : i32, i32, i32
  }
  func.func @transform_5(%arg0: i32) -> (i32, i32, i32) {
    %c0_i32 = arith.constant 0 : i32
    %c0_i32_0 = arith.constant 0 : i32
    %c0_i32_1 = arith.constant 0 : i32
    return %arg0, %c0_i32, %c0_i32_0 : i32, i32, i32
  }
}

</mosaic_0001>

<llo_original>
// kernel: tpu_custom_call.1
$region0: #{tpu_custom_call.1}
  #allocation0 [shape = 'u32[]', space=smem, size = 0x4, offset = 0x4, fixed_abs, tag = 'smem constant byte address 0x4 - core index']
  #allocation1 [shape = 'u32[144,128]{1,0:T(1,128)}', space=vmem, size = 0x12000, scoped, tag = 'internal scratch']
  %s0 = inlined_call_operand.vmem [shape: f32[64,4], index: 0, kind: input, shape index: {}]
  %s1 = inlined_call_operand.vmem [shape: f32[1,4], index: 1, kind: input, shape index: {}]
  %s2 = inlined_call_operand.vmem [shape: f32[4,64], index: 2, kind: input, shape index: {}]
  %s3 = inlined_call_operand.vmem [shape: f32[1,64], index: 3, kind: input, shape index: {}]
  %s4 = inlined_call_operand.hbm [shape: f32[2,64,256], index: 4, kind: input, shape index: {}]
  %s5 = inlined_call_operand.hbm [shape: f32[2,64,256], index: 5, kind: output, shape index: {}]
  %s6 = sld [smem:[#allocation0]]
  $region34: #{tpu_custom_call.1} parent=0
    _
  %s8 = ssub.s32 1, %s6
  %s9 = scalar_select 0, %s8, %s6
  $region1: #{tpu_custom_call.1} parent=0
    #allocation2 [shape = 'u8[131072]{0}', space=vmem, size = 0x20000, scoped, tag = 'input window, operand 4, single buffered']
    #allocation3 [shape = 's32[1]{0}', space=sflag, size = 0x4, scoped, tag = 'scoped memory for tpu_custom_call.1']
    #allocation4 [shape = 's32[1]{0}', space=sflag, size = 0x4, scoped, tag = 'scoped memory for tpu_custom_call.1']
    #allocation5 [shape = 'u8[131072]{0}', space=vmem, size = 0x20000, scoped, tag = 'output window, operand 0, single buffered']
    %10 = vsyncpa [#allocation3], 0
    %11 = vsyncpa [#allocation4], 0
    // Predicated region
    $region2: #{tpu_custom_call.1} parent=1 // pred_check
      _
    $region3: #{tpu_custom_call.1} parent=1 // pred_check_branch
      %13 = sbr.rel (0) target = $region5
    $region4: #{tpu_custom_call.1} parent=1 // pred_region
      _
    $region5: #{tpu_custom_call.1} parent=1 // pred_fallthru
      _
    // Predicated region
    $region6: #{tpu_custom_call.1} parent=1 // pred_check
      _
    $region7: #{tpu_custom_call.1} parent=1 // pred_check_branch
      %15 = sbr.rel (0) target = $region9
    $region8: #{tpu_custom_call.1} parent=1 // pred_region
      _
    $region9: #{tpu_custom_call.1} parent=1 // pred_fallthru
      _
    // Predicated region
    $region10: #{tpu_custom_call.1} parent=1 // pred_check
      _
    $region11: #{tpu_custom_call.1} parent=1 // pred_check_branch
      %17 = sbr.rel (0) target = $region13
    $region12: #{tpu_custom_call.1} parent=1 // pred_region
      _
    $region13: #{tpu_custom_call.1} parent=1 // pred_fallthru
      _
    // Predicated region
    $region14: #{tpu_custom_call.1} parent=1 // pred_check
      _
    $region15: #{tpu_custom_call.1} parent=1 // pred_check_branch
      %19 = sbr.rel (0) target = $region17
    $region16: #{tpu_custom_call.1} parent=1 // pred_region
      _
    $region17: #{tpu_custom_call.1} parent=1 // pred_fallthru
      _
    // Predicated region
    $region18: #{tpu_custom_call.1} parent=1 // pred_check
      _
    $region19: #{tpu_custom_call.1} parent=1 // pred_check_branch
      %21 = sbr.rel (0) target = $region21
    $region20: #{tpu_custom_call.1} parent=1 // pred_region
      %s23 = ssub.s32 4096, 4096
      %24 = vsyncadd [#allocation3], %s23
      %s25 = sshll.u32 [#allocation2], 4
      %s26 = int_to_ptr.vmem [resolvable:$true] %s25
      %31 = dma.hbm_to_vmem [thread:$0]  %s4, 4096, %s26, [#allocation3], 256, 256, 16
    $region21: #{tpu_custom_call.1} parent=1 // pred_fallthru
      _
    // Predicated region
    $region22: #{tpu_custom_call.1} parent=1 // pred_check
      _
    $region23: #{tpu_custom_call.1} parent=1 // pred_check_branch
      %33 = sbr.rel (0) target = $region25
    $region24: #{tpu_custom_call.1} parent=1 // pred_region
      %34 = dma.done [#allocation3], 4096
    $region25: #{tpu_custom_call.1} parent=1 // pred_fallthru
      _
    %v35 = vld [vmem:[#allocation2] sm:$0xff]
    %v36 = vld [vmem:[#allocation2 + $0x8] sm:$0xff]
    %v37 = vld [vmem:[#allocation2 + $0x10] sm:$0xff]
    %v38 = vld [vmem:[#allocation2 + $0x18] sm:$0xff]
    %v39 = vld [vmem:[#allocation2 + $0x20] sm:$0xff]
    %v40 = vld [vmem:[#allocation2 + $0x28] sm:$0xff]
    %v41 = vld [vmem:[#allocation2 + $0x30] sm:$0xff]
    %v42 = vld [vmem:[#allocation2 + $0x38] sm:$0xff]
    %v43 = vld [vmem:[#allocation2 + $0x40] sm:$0xff]
    %v44 = vld [vmem:[#allocation2 + $0x48] sm:$0xff]
    %v45 = vld [vmem:[#allocation2 + $0x50] sm:$0xff]
    %v46 = vld [vmem:[#allocation2 + $0x58] sm:$0xff]
    %v47 = vld [vmem:[#allocation2 + $0x60] sm:$0xff]
    %v48 = vld [vmem:[#allocation2 + $0x68] sm:$0xff]
    %v49 = vld [vmem:[#allocation2 + $0x70] sm:$0xff]
    %v50 = vld [vmem:[#allocation2 + $0x78] sm:$0xff]
    %v51 = vld [vmem:[#allocation2 + $0x80] sm:$0xff]
    %v52 = vld [vmem:[#allocation2 + $0x88] sm:$0xff]
    %v53 = vld [vmem:[#allocation2 + $0x90] sm:$0xff]
    %v54 = vld [vmem:[#allocation2 + $0x98] sm:$0xff]
    %v55 = vld [vmem:[#allocation2 + $0xa0] sm:$0xff]
    %v56 = vld [vmem:[#allocation2 + $0xa8] sm:$0xff]
    %v57 = vld [vmem:[#allocation2 + $0xb0] sm:$0xff]
    %v58 = vld [vmem:[#allocation2 + $0xb8] sm:$0xff]
    %v59 = vld [vmem:[#allocation2 + $0xc0] sm:$0xff]
    %v60 = vld [vmem:[#allocation2 + $0xc8] sm:$0xff]
    %v61 = vld [vmem:[#allocation2 + $0xd0] sm:$0xff]
    %v62 = vld [vmem:[#allocation2 + $0xd8] sm:$0xff]
    %v63 = vld [vmem:[#allocation2 + $0xe0] sm:$0xff]
    %v64 = vld [vmem:[#allocation2 + $0xe8] sm:$0xff]
    %v65 = vld [vmem:[#allocation2 + $0xf0] sm:$0xff]
    %v66 = vld [vmem:[#allocation2 + $0xf8] sm:$0xff]
    %v67 = vadd.f32 %v35, %v36
    %68 = vadd.xlane.f32.xlu0 %v67
    %v69 = vpop.xlane.xlu0 %68
    %v70 = vadd.f32 %v37, %v38
    %71 = vadd.xlane.f32.xlu0 %v70
    %v72 = vpop.xlane.xlu0 %71
    %v73 = vadd.f32 %v39, %v40
    %74 = vadd.xlane.f32.xlu0 %v73
    %v75 = vpop.xlane.xlu0 %74
    %v76 = vadd.f32 %v41, %v42
    %77 = vadd.xlane.f32.xlu0 %v76
    %v78 = vpop.xlane.xlu0 %77
    %v79 = vadd.f32 %v43, %v44
    %80 = vadd.xlane.f32.xlu0 %v79
    %v81 = vpop.xlane.xlu0 %80
    %v82 = vadd.f32 %v45, %v46
    %83 = vadd.xlane.f32.xlu0 %v82
    %v84 = vpop.xlane.xlu0 %83
    %v85 = vadd.f32 %v47, %v48
    %86 = vadd.xlane.f32.xlu0 %v85
    %v87 = vpop.xlane.xlu0 %86
    %v88 = vadd.f32 %v49, %v50
    %89 = vadd.xlane.f32.xlu0 %v88
    %v90 = vpop.xlane.xlu0 %89
    %v91 = vadd.f32 %v51, %v52
    %92 = vadd.xlane.f32.xlu0 %v91
    %v93 = vpop.xlane.xlu0 %92
    %v94 = vadd.f32 %v53, %v54
    %95 = vadd.xlane.f32.xlu0 %v94
    %v96 = vpop.xlane.xlu0 %95
    %v97 = vadd.f32 %v55, %v56
    %98 = vadd.xlane.f32.xlu0 %v97
    %v99 = vpop.xlane.xlu0 %98
    %v100 = vadd.f32 %v57, %v58
    %101 = vadd.xlane.f32.xlu0 %v100
    %v102 = vpop.xlane.xlu0 %101
    %v103 = vadd.f32 %v59, %v60
    %104 = vadd.xlane.f32.xlu0 %v103
    %v105 = vpop.xlane.xlu0 %104
    %v106 = vadd.f32 %v61, %v62
    %107 = vadd.xlane.f32.xlu0 %v106
    %v108 = vpop.xlane.xlu0 %107
    %v109 = vadd.f32 %v63, %v64
    %110 = vadd.xlane.f32.xlu0 %v109
    %v111 = vpop.xlane.xlu0 %110
    %v112 = vadd.f32 %v65, %v66
    %113 = vadd.xlane.f32.xlu0 %v112
    %v114 = vpop.xlane.xlu0 %113
    %v115 = vmax.f32 %v35, %v36
    %116 = vmax.xlane.f32.xlu0 %v115
    %v117 = vpop.xlane.xlu0 %116
    %v118 = vmax.f32 %v37, %v38
    %119 = vmax.xlane.f32.xlu0 %v118
    %v120 = vpop.xlane.xlu0 %119
    %v121 = vmax.f32 %v39, %v40
    %122 = vmax.xlane.f32.xlu0 %v121
    %v123 = vpop.xlane.xlu0 %122
    %v124 = vmax.f32 %v41, %v42
    %125 = vmax.xlane.f32.xlu0 %v124
    %v126 = vpop.xlane.xlu0 %125
    %v127 = vmax.f32 %v43, %v44
    %128 = vmax.xlane.f32.xlu0 %v127
    %v129 = vpop.xlane.xlu0 %128
    %v130 = vmax.f32 %v45, %v46
    %131 = vmax.xlane.f32.xlu0 %v130
    %v132 = vpop.xlane.xlu0 %131
    %v133 = vmax.f32 %v47, %v48
    %134 = vmax.xlane.f32.xlu0 %v133
    %v135 = vpop.xlane.xlu0 %134
    %v136 = vmax.f32 %v49, %v50
    %137 = vmax.xlane.f32.xlu0 %v136
    %v138 = vpop.xlane.xlu0 %137
    %v139 = vmax.f32 %v51, %v52
    %140 = vmax.xlane.f32.xlu0 %v139
    %v141 = vpop.xlane.xlu0 %140
    %v142 = vmax.f32 %v53, %v54
    %143 = vmax.xlane.f32.xlu0 %v142
    %v144 = vpop.xlane.xlu0 %143
    %v145 = vmax.f32 %v55, %v56
    %146 = vmax.xlane.f32.xlu0 %v145
    %v147 = vpop.xlane.xlu0 %146
    %v148 = vmax.f32 %v57, %v58
    %149 = vmax.xlane.f32.xlu0 %v148
    %v150 = vpop.xlane.xlu0 %149
    %v151 = vmax.f32 %v59, %v60
    %152 = vmax.xlane.f32.xlu0 %v151
    %v153 = vpop.xlane.xlu0 %152
    %v154 = vmax.f32 %v61, %v62
    %155 = vmax.xlane.f32.xlu0 %v154
    %v156 = vpop.xlane.xlu0 %155
    %v157 = vmax.f32 %v63, %v64
    %158 = vmax.xlane.f32.xlu0 %v157
    %v159 = vpop.xlane.xlu0 %158
    %v160 = vmax.f32 %v65, %v66
    %161 = vmax.xlane.f32.xlu0 %v160
    %v162 = vpop.xlane.xlu0 %161
    %v163 = vld [vmem:[%s0] sm:$0xff]
    %v164 = vld [vmem:[%s0 + $0x8] sm:$0xff]
    %v165 = vld [vmem:[%s0 + $0x10] sm:$0xff]
    %v166 = vld [vmem:[%s0 + $0x18] sm:$0xff]
    %v167 = vld [vmem:[%s0 + $0x20] sm:$0xff]
    %v168 = vld [vmem:[%s0 + $0x28] sm:$0xff]
    %v169 = vld [vmem:[%s0 + $0x30] sm:$0xff]
    %v170 = vld [vmem:[%s0 + $0x38] sm:$0xff]
    %v171 = vld [vmem:[%s1] sm:$0x1]
    %v172 = vld [vmem:[%s2] sm:$0xf]
    %v173 = vld [vmem:[%s3] sm:$0x1]
    %v174 = vmul.f32 %v69, 0.00390625
    %v175 = vmul.f32 %v72, 0.00390625
    %v176 = vmul.f32 %v75, 0.00390625
    %v177 = vmul.f32 %v78, 0.00390625
    %v178 = vmul.f32 %v81, 0.00390625
    %v179 = vmul.f32 %v84, 0.00390625
    %v180 = vmul.f32 %v87, 0.00390625
    %v181 = vmul.f32 %v90, 0.00390625
    %v182 = vmul.f32 %v93, 0.00390625
    %v183 = vmul.f32 %v96, 0.00390625
    %v184 = vmul.f32 %v99, 0.00390625
    %v185 = vmul.f32 %v102, 0.00390625
    %v186 = vmul.f32 %v105, 0.00390625
    %v187 = vmul.f32 %v108, 0.00390625
    %v188 = vmul.f32 %v111, 0.00390625
    %v189 = vmul.f32 %v114, 0.00390625
    %v191 = vlaneseq
    %v192 = vshrl.u32 %v191, 7
    %v193 = vsub.s32 0, %v192
    %v194 = vrot.slane %v171, %v193
    %v212 = vlaneseq
    %v213 = vand.u32 %v212, 127
    %v214 = vlaneseq
    %v215 = vshrl.u32 %v214, 7
    %v216 = vsub.s32 %v213, %v215
    %v217 = vrot.slane %v174, %v216
    %v218 = vadd.s32 %v213, 4294967288
    %v219 = vlaneseq
    %v220 = vshrl.u32 %v219, 7
    %v221 = vsub.s32 %v218, %v220
    %v222 = vrot.slane %v175, %v221
    %vm223 = vcmask 130112
    %v224 = vsel %vm223, %v222, %v217
    %v225 = vadd.s32 %v213, 4294967280
    %v226 = vlaneseq
    %v227 = vshrl.u32 %v226, 7
    %v228 = vsub.s32 %v225, %v227
    %v229 = vrot.slane %v176, %v228
    %vm230 = vcmask 195712
    %v231 = vsel %vm230, %v229, %v224
    %v232 = vadd.s32 %v213, 4294967272
    %v233 = vlaneseq
    %v234 = vshrl.u32 %v233, 7
    %v235 = vsub.s32 %v232, %v234
    %v236 = vrot.slane %v177, %v235
    %vm237 = vcmask 261312
    %v238 = vsel %vm237, %v236, %v231
    %v239 = vadd.s32 %v213, 4294967264
    %v240 = vlaneseq
    %v241 = vshrl.u32 %v240, 7
    %v242 = vsub.s32 %v239, %v241
    %v243 = vrot.slane %v178, %v242
    %vm244 = vcmask 326912
    %v245 = vsel %vm244, %v243, %v238
    %v246 = vadd.s32 %v213, 4294967256
    %v247 = vlaneseq
    %v248 = vshrl.u32 %v247, 7
    %v249 = vsub.s32 %v246, %v248
    %v250 = vrot.slane %v179, %v249
    %vm251 = vcmask 392512
    %v252 = vsel %vm251, %v250, %v245
    %v253 = vadd.s32 %v213, 4294967248
    %v254 = vlaneseq
    %v255 = vshrl.u32 %v254, 7
    %v256 = vsub.s32 %v253, %v255
    %v257 = vrot.slane %v180, %v256
    %vm258 = vcmask 458112
    %v259 = vsel %vm258, %v257, %v252
    %v260 = vadd.s32 %v213, 4294967240
    %v261 = vlaneseq
    %v262 = vshrl.u32 %v261, 7
    %v263 = vsub.s32 %v260, %v262
    %v264 = vrot.slane %v181, %v263
    %vm265 = vcmask 523712
    %v266 = vsel %vm265, %v264, %v259
    %v267 = vlaneseq
    %v268 = vshrl.u32 %v267, 7
    %v269 = vsub.s32 %v213, %v268
    %v270 = vrot.slane %v182, %v269
    %v271 = vlaneseq
    %v272 = vshrl.u32 %v271, 7
    %v273 = vsub.s32 %v218, %v272
    %v274 = vrot.slane %v183, %v273
    %v275 = vsel %vm223, %v274, %v270
    %v276 = vlaneseq
    %v277 = vshrl.u32 %v276, 7
    %v278 = vsub.s32 %v225, %v277
    %v279 = vrot.slane %v184, %v278
    %v280 = vsel %vm230, %v279, %v275
    %v281 = vlaneseq
    %v282 = vshrl.u32 %v281, 7
    %v283 = vsub.s32 %v232, %v282
    %v284 = vrot.slane %v185, %v283
    %v285 = vsel %vm237, %v284, %v280
    %v286 = vlaneseq
    %v287 = vshrl.u32 %v286, 7
    %v288 = vsub.s32 %v239, %v287
    %v289 = vrot.slane %v186, %v288
    %v290 = vsel %vm244, %v289, %v285
    %v291 = vlaneseq
    %v292 = vshrl.u32 %v291, 7
    %v293 = vsub.s32 %v246, %v292
    %v294 = vrot.slane %v187, %v293
    %v295 = vsel %vm251, %v294, %v290
    %v296 = vlaneseq
    %v297 = vshrl.u32 %v296, 7
    %v298 = vsub.s32 %v253, %v297
    %v299 = vrot.slane %v188, %v298
    %v300 = vsel %vm258, %v299, %v295
    %v301 = vlaneseq
    %v302 = vshrl.u32 %v301, 7
    %v303 = vsub.s32 %v260, %v302
    %v304 = vrot.slane %v189, %v303
    %v305 = vsel %vm265, %v304, %v300
    %vm306 = vcmask 1041409
    %v307 = vsel %vm306, %v305, %v266
    %vm308 = vcmask 523264
    %v309 = vsel %vm308, %v307, 0
    %311 = vmatprep.subr.mxu0 0.0
    %312 = vmatpush1.msra.mxu0 %v163
    %313 = vmatprep.subr.mxu0 0.0
    %314 = vmatpush1.msra.mxu0 %v164
    %315 = vmatprep.subr.mxu0 0.0
    %316 = vmatpush1.msra.mxu0 %v165
    %317 = vmatprep.subr.mxu0 0.0
    %318 = vmatpush1.msra.mxu0 %v166
    %319 = vmatprep.subr.mxu0 0.0
    %320 = vmatpush1.msra.mxu0 %v167
    %321 = vmatprep.subr.mxu0 0.0
    %322 = vmatpush1.msra.mxu0 %v168
    %323 = vmatprep.subr.mxu0 0.0
    %324 = vmatpush1.msra.mxu0 %v169
    %325 = vmatprep.subr.mxu0 0.0
    %326 = vmatpush1.msra.mxu0 %v170
    %327 = vmatprep.subr.mxu0 0.0
    %328 = vmatpush1.msra.mxu0 0.0
    %329 = vmatprep.subr.mxu0 0.0
    %330 = vmatpush1.msra.mxu0 0.0
    %331 = vmatprep.subr.mxu0 0.0
    %332 = vmatpush1.msra.mxu0 0.0
    %333 = vmatprep.subr.mxu0 0.0
    %334 = vmatpush1.msra.mxu0 0.0
    %335 = vmatprep.subr.mxu0 0.0
    %336 = vmatpush1.msra.mxu0 0.0
    %337 = vmatprep.subr.mxu0 0.0
    %338 = vmatpush1.msra.mxu0 0.0
    %339 = vmatprep.subr.mxu0 0.0
    %340 = vmatpush1.msra.mxu0 0.0
    %341 = vmatprep.subr.mxu0 0.0
    %342 = vmatpush1.msra.mxu0 0.0
    %343 = vmatprep.subr.mxu0 0.0
    %344 = vmatpush1.msra.mxu0 0.0
    %345 = vmatprep.subr.mxu0 0.0
    %346 = vmatpush1.msra.mxu0 0.0
    %347 = vmatprep.subr.mxu0 0.0
    %348 = vmatpush1.msra.mxu0 0.0
    %349 = vmatprep.subr.mxu0 0.0
    %350 = vmatpush1.msra.mxu0 0.0
    %351 = vmatprep.subr.mxu0 0.0
    %352 = vmatpush1.msra.mxu0 0.0
    %353 = vmatprep.subr.mxu0 0.0
    %354 = vmatpush1.msra.mxu0 0.0
    %355 = vmatprep.subr.mxu0 0.0
    %356 = vmatpush1.msra.mxu0 0.0
    %357 = vmatprep.subr.mxu0 0.0
    %358 = vmatpush1.msra.mxu0 0.0
    %359 = vmatprep.subr.mxu0 0.0
    %360 = vmatpush1.msra.mxu0 0.0
    %361 = vmatprep.subr.mxu0 0.0
    %362 = vmatpush1.msra.mxu0 0.0
    %363 = vmatprep.subr.mxu0 0.0
    %364 = vmatpush1.msra.mxu0 0.0
    %365 = vmatprep.subr.mxu0 0.0
    %366 = vmatpush1.msra.mxu0 0.0
    %367 = vmatprep.subr.mxu0 0.0
    %368 = vmatpush1.msra.mxu0 0.0
    %369 = vmatprep.subr.mxu0 0.0
    %370 = vmatpush1.msra.mxu0 0.0
    %371 = vmatprep.subr.mxu0 0.0
    %372 = vmatpush1.msra.mxu0 0.0
    %373 = vmatprep.subr.mxu0 0.0
    %374 = vmatpush1.msra.mxu0 0.0
    %375 = vmatprep.mubr.f32.mxu0 0.0
    %376 = vmatmul.mubr.f32.gmra.mrb[0].mxu0 %v309
    %v377 = vpop.f32.mrb[0].mxu0
    %v378 = vadd.f32 %v194, %v377
    %v379 = vpop.f32.mrb[0].mxu0
    %380 = vdwg.mxu0
    %v381 = vmax.f32 %v378, 0.0
    %v383 = vlaneseq
    %v384 = vshrl.u32 %v383, 7
    %v385 = vsub.s32 0, %v384
    %v386 = vrot.slane %v173, %v385
    %vm388 = vcmask 31744
    %v390 = vsel %vm388, %v381, 0
    %vm392 = vcmask 1043456
    %v394 = vsel %vm392, %v172, 0
    %396 = vmatprep.subr.mxu0 0.0
    %397 = vmatpush1.msra.mxu0 %v394
    %398 = vmatprep.subr.mxu0 0.0
    %399 = vmatpush1.msra.mxu0 0.0
    %400 = vmatprep.subr.mxu0 0.0
    %401 = vmatpush1.msra.mxu0 0.0
    %402 = vmatprep.subr.mxu0 0.0
    %403 = vmatpush1.msra.mxu0 0.0
    %404 = vmatprep.subr.mxu0 0.0
    %405 = vmatpush1.msra.mxu0 0.0
    %406 = vmatprep.subr.mxu0 0.0
    %407 = vmatpush1.msra.mxu0 0.0
    %408 = vmatprep.subr.mxu0 0.0
    %409 = vmatpush1.msra.mxu0 0.0
    %410 = vmatprep.subr.mxu0 0.0
    %411 = vmatpush1.msra.mxu0 0.0
    %412 = vmatprep.subr.mxu0 0.0
    %413 = vmatpush1.msra.mxu0 0.0
    %414 = vmatprep.subr.mxu0 0.0
    %415 = vmatpush1.msra.mxu0 0.0
    %416 = vmatprep.subr.mxu0 0.0
    %417 = vmatpush1.msra.mxu0 0.0
    %418 = vmatprep.subr.mxu0 0.0
    %419 = vmatpush1.msra.mxu0 0.0
    %420 = vmatprep.subr.mxu0 0.0
    %421 = vmatpush1.msra.mxu0 0.0
    %422 = vmatprep.subr.mxu0 0.0
    %423 = vmatpush1.msra.mxu0 0.0
    %424 = vmatprep.subr.mxu0 0.0
    %425 = vmatpush1.msra.mxu0 0.0
    %426 = vmatprep.subr.mxu0 0.0
    %427 = vmatpush1.msra.mxu0 0.0
    %428 = vmatprep.subr.mxu0 0.0
    %429 = vmatpush1.msra.mxu0 0.0
    %430 = vmatprep.subr.mxu0 0.0
    %431 = vmatpush1.msra.mxu0 0.0
    %432 = vmatprep.subr.mxu0 0.0
    %433 = vmatpush1.msra.mxu0 0.0
    %434 = vmatprep.subr.mxu0 0.0
    %435 = vmatpush1.msra.mxu0 0.0
    %436 = vmatprep.subr.mxu0 0.0
    %437 = vmatpush1.msra.mxu0 0.0
    %438 = vmatprep.subr.mxu0 0.0
    %439 = vmatpush1.msra.mxu0 0.0
    %440 = vmatprep.subr.mxu0 0.0
    %441 = vmatpush1.msra.mxu0 0.0
    %442 = vmatprep.subr.mxu0 0.0
    %443 = vmatpush1.msra.mxu0 0.0
    %444 = vmatprep.subr.mxu0 0.0
    %445 = vmatpush1.msra.mxu0 0.0
    %446 = vmatprep.subr.mxu0 0.0
    %447 = vmatpush1.msra.mxu0 0.0
    %448 = vmatprep.subr.mxu0 0.0
    %449 = vmatpush1.msra.mxu0 0.0
    %450 = vmatprep.subr.mxu0 0.0
    %451 = vmatpush1.msra.mxu0 0.0
    %452 = vmatprep.subr.mxu0 0.0
    %453 = vmatpush1.msra.mxu0 0.0
    %454 = vmatprep.subr.mxu0 0.0
    %455 = vmatpush1.msra.mxu0 0.0
    %456 = vmatprep.subr.mxu0 0.0
    %457 = vmatpush1.msra.mxu0 0.0
    %458 = vmatprep.subr.mxu0 0.0
    %459 = vmatpush1.msra.mxu0 0.0
    %460 = vmatprep.mubr.f32.mxu0 0.0
    %461 = vmatmul.mubr.f32.gmra.mrb[0].mxu0 %v390
    %v462 = vpop.f32.mrb[0].mxu0
    %v463 = vadd.f32 %v386, %v462
    %v464 = vpop.f32.mrb[0].mxu0
    %465 = vdwg.mxu0
    %v482 = vlaneseq
    %v483 = vshrl.u32 %v482, 7
    %v484 = vsub.s32 %v213, %v483
    %v485 = vrot.slane %v117, %v484
    %v486 = vlaneseq
    %v487 = vshrl.u32 %v486, 7
    %v488 = vsub.s32 %v218, %v487
    %v489 = vrot.slane %v120, %v488
    %v490 = vsel %vm223, %v489, %v485
    %v491 = vlaneseq
    %v492 = vshrl.u32 %v491, 7
    %v493 = vsub.s32 %v225, %v492
    %v494 = vrot.slane %v123, %v493
    %v495 = vsel %vm230, %v494, %v490
    %v496 = vlaneseq
    %v497 = vshrl.u32 %v496, 7
    %v498 = vsub.s32 %v232, %v497
    %v499 = vrot.slane %v126, %v498
    %v500 = vsel %vm237, %v499, %v495
    %v501 = vlaneseq
    %v502 = vshrl.u32 %v501, 7
    %v503 = vsub.s32 %v239, %v502
    %v504 = vrot.slane %v129, %v503
    %v505 = vsel %vm244, %v504, %v500
    %v506 = vlaneseq
    %v507 = vshrl.u32 %v506, 7
    %v508 = vsub.s32 %v246, %v507
    %v509 = vrot.slane %v132, %v508
    %v510 = vsel %vm251, %v509, %v505
    %v511 = vlaneseq
    %v512 = vshrl.u32 %v511, 7
    %v513 = vsub.s32 %v253, %v512
    %v514 = vrot.slane %v135, %v513
    %v515 = vsel %vm258, %v514, %v510
    %v516 = vlaneseq
    %v517 = vshrl.u32 %v516, 7
    %v518 = vsub.s32 %v260, %v517
    %v519 = vrot.slane %v138, %v518
    %v520 = vsel %vm265, %v519, %v515
    %v521 = vlaneseq
    %v522 = vshrl.u32 %v521, 7
    %v523 = vsub.s32 %v213, %v522
    %v524 = vrot.slane %v141, %v523
    %v525 = vlaneseq
    %v526 = vshrl.u32 %v525, 7
    %v527 = vsub.s32 %v218, %v526
    %v528 = vrot.slane %v144, %v527
    %v529 = vsel %vm223, %v528, %v524
    %v530 = vlaneseq
    %v531 = vshrl.u32 %v530, 7
    %v532 = vsub.s32 %v225, %v531
    %v533 = vrot.slane %v147, %v532
    %v534 = vsel %vm230, %v533, %v529
    %v535 = vlaneseq
    %v536 = vshrl.u32 %v535, 7
    %v537 = vsub.s32 %v232, %v536
    %v538 = vrot.slane %v150, %v537
    %v539 = vsel %vm237, %v538, %v534
    %v540 = vlaneseq
    %v541 = vshrl.u32 %v540, 7
    %v542 = vsub.s32 %v239, %v541
    %v543 = vrot.slane %v153, %v542
    %v544 = vsel %vm244, %v543, %v539
    %v545 = vlaneseq
    %v546 = vshrl.u32 %v545, 7
    %v547 = vsub.s32 %v246, %v546
    %v548 = vrot.slane %v156, %v547
    %v549 = vsel %vm251, %v548, %v544
    %v550 = vlaneseq
    %v551 = vshrl.u32 %v550, 7
    %v552 = vsub.s32 %v253, %v551
    %v553 = vrot.slane %v159, %v552
    %v554 = vsel %vm258, %v553, %v549
    %v555 = vlaneseq
    %v556 = vshrl.u32 %v555, 7
    %v557 = vsub.s32 %v260, %v556
    %v558 = vrot.slane %v162, %v557
    %v559 = vsel %vm265, %v558, %v554
    %v560 = vsel %vm306, %v559, %v520
    %v561 = vsel %vm308, %v560, 0
    %563 = vmatprep.subr.mxu0 0.0
    %564 = vmatpush1.msra.mxu0 %v163
    %565 = vmatprep.subr.mxu0 0.0
    %566 = vmatpush1.msra.mxu0 %v164
    %567 = vmatprep.subr.mxu0 0.0
    %568 = vmatpush1.msra.mxu0 %v165
    %569 = vmatprep.subr.mxu0 0.0
    %570 = vmatpush1.msra.mxu0 %v166
    %571 = vmatprep.subr.mxu0 0.0
    %572 = vmatpush1.msra.mxu0 %v167
    %573 = vmatprep.subr.mxu0 0.0
    %574 = vmatpush1.msra.mxu0 %v168
    %575 = vmatprep.subr.mxu0 0.0
    %576 = vmatpush1.msra.mxu0 %v169
    %577 = vmatprep.subr.mxu0 0.0
    %578 = vmatpush1.msra.mxu0 %v170
    %579 = vmatprep.subr.mxu0 0.0
    %580 = vmatpush1.msra.mxu0 0.0
    %581 = vmatprep.subr.mxu0 0.0
    %582 = vmatpush1.msra.mxu0 0.0
    %583 = vmatprep.subr.mxu0 0.0
    %584 = vmatpush1.msra.mxu0 0.0
    %585 = vmatprep.subr.mxu0 0.0
    %586 = vmatpush1.msra.mxu0 0.0
    %587 = vmatprep.subr.mxu0 0.0
    %588 = vmatpush1.msra.mxu0 0.0
    %589 = vmatprep.subr.mxu0 0.0
    %590 = vmatpush1.msra.mxu0 0.0
    %591 = vmatprep.subr.mxu0 0.0
    %592 = vmatpush1.msra.mxu0 0.0
    %593 = vmatprep.subr.mxu0 0.0
    %594 = vmatpush1.msra.mxu0 0.0
    %595 = vmatprep.subr.mxu0 0.0
    %596 = vmatpush1.msra.mxu0 0.0
    %597 = vmatprep.subr.mxu0 0.0
    %598 = vmatpush1.msra.mxu0 0.0
    %599 = vmatprep.subr.mxu0 0.0
    %600 = vmatpush1.msra.mxu0 0.0
    %601 = vmatprep.subr.mxu0 0.0
    %602 = vmatpush1.msra.mxu0 0.0
    %603 = vmatprep.subr.mxu0 0.0
    %604 = vmatpush1.msra.mxu0 0.0
    %605 = vmatprep.subr.mxu0 0.0
    %606 = vmatpush1.msra.mxu0 0.0
    %607 = vmatprep.subr.mxu0 0.0
    %608 = vmatpush1.msra.mxu0 0.0
    %609 = vmatprep.subr.mxu0 0.0
    %610 = vmatpush1.msra.mxu0 0.0
    %611 = vmatprep.subr.mxu0 0.0
    %612 = vmatpush1.msra.mxu0 0.0
    %613 = vmatprep.subr.mxu0 0.0
    %614 = vmatpush1.msra.mxu0 0.0
    %615 = vmatprep.subr.mxu0 0.0
    %616 = vmatpush1.msra.mxu0 0.0
    %617 = vmatprep.subr.mxu0 0.0
    %618 = vmatpush1.msra.mxu0 0.0
    %619 = vmatprep.subr.mxu0 0.0
    %620 = vmatpush1.msra.mxu0 0.0
    %621 = vmatprep.subr.mxu0 0.0
    %622 = vmatpush1.msra.mxu0 0.0
    %623 = vmatprep.subr.mxu0 0.0
    %624 = vmatpush1.msra.mxu0 0.0
    %625 = vmatprep.subr.mxu0 0.0
    %626 = vmatpush1.msra.mxu0 0.0
    %627 = vmatprep.mubr.f32.mxu0 0.0
    %628 = vmatmul.mubr.f32.gmra.mrb[0].mxu0 %v561
    %v629 = vpop.f32.mrb[0].mxu0
    %v630 = vadd.f32 %v194, %v629
    %v631 = vpop.f32.mrb[0].mxu0
    %632 = vdwg.mxu0
    %v633 = vmax.f32 %v630, 0.0
    %v635 = vsel %vm388, %v633, 0
    %637 = vmatprep.subr.mxu0 0.0
    %638 = vmatpush1.msra.mxu0 %v394
    %639 = vmatprep.subr.mxu0 0.0
    %640 = vmatpush1.msra.mxu0 0.0
    %641 = vmatprep.subr.mxu0 0.0
    %642 = vmatpush1.msra.mxu0 0.0
    %643 = vmatprep.subr.mxu0 0.0
    %644 = vmatpush1.msra.mxu0 0.0
    %645 = vmatprep.subr.mxu0 0.0
    %646 = vmatpush1.msra.mxu0 0.0
    %647 = vmatprep.subr.mxu0 0.0
    %648 = vmatpush1.msra.mxu0 0.0
    %649 = vmatprep.subr.mxu0 0.0
    %650 = vmatpush1.msra.mxu0 0.0
    %651 = vmatprep.subr.mxu0 0.0
    %652 = vmatpush1.msra.mxu0 0.0
    %653 = vmatprep.subr.mxu0 0.0
    %654 = vmatpush1.msra.mxu0 0.0
    %655 = vmatprep.subr.mxu0 0.0
    %656 = vmatpush1.msra.mxu0 0.0
    %657 = vmatprep.subr.mxu0 0.0
    %658 = vmatpush1.msra.mxu0 0.0
    %659 = vmatprep.subr.mxu0 0.0
    %660 = vmatpush1.msra.mxu0 0.0
    %661 = vmatprep.subr.mxu0 0.0
    %662 = vmatpush1.msra.mxu0 0.0
    %663 = vmatprep.subr.mxu0 0.0
    %664 = vmatpush1.msra.mxu0 0.0
    %665 = vmatprep.subr.mxu0 0.0
    %666 = vmatpush1.msra.mxu0 0.0
    %667 = vmatprep.subr.mxu0 0.0
    %668 = vmatpush1.msra.mxu0 0.0
    %669 = vmatprep.subr.mxu0 0.0
    %670 = vmatpush1.msra.mxu0 0.0
    %671 = vmatprep.subr.mxu0 0.0
    %672 = vmatpush1.msra.mxu0 0.0
    %673 = vmatprep.subr.mxu0 0.0
    %674 = vmatpush1.msra.mxu0 0.0
    %675 = vmatprep.subr.mxu0 0.0
    %676 = vmatpush1.msra.mxu0 0.0
    %677 = vmatprep.subr.mxu0 0.0
    %678 = vmatpush1.msra.mxu0 0.0
    %679 = vmatprep.subr.mxu0 0.0
    %680 = vmatpush1.msra.mxu0 0.0
    %681 = vmatprep.subr.mxu0 0.0
    %682 = vmatpush1.msra.mxu0 0.0
    %683 = vmatprep.subr.mxu0 0.0
    %684 = vmatpush1.msra.mxu0 0.0
    %685 = vmatprep.subr.mxu0 0.0
    %686 = vmatpush1.msra.mxu0 0.0
    %687 = vmatprep.subr.mxu0 0.0
    %688 = vmatpush1.msra.mxu0 0.0
    %689 = vmatprep.subr.mxu0 0.0
    %690 = vmatpush1.msra.mxu0 0.0
    %691 = vmatprep.subr.mxu0 0.0
    %692 = vmatpush1.msra.mxu0 0.0
    %693 = vmatprep.subr.mxu0 0.0
    %694 = vmatpush1.msra.mxu0 0.0
    %695 = vmatprep.subr.mxu0 0.0
    %696 = vmatpush1.msra.mxu0 0.0
    %697 = vmatprep.subr.mxu0 0.0
    %698 = vmatpush1.msra.mxu0 0.0
    %699 = vmatprep.subr.mxu0 0.0
    %700 = vmatpush1.msra.mxu0 0.0
    %701 = vmatprep.mubr.f32.mxu0 0.0
    %702 = vmatmul.mubr.f32.gmra.mrb[0].mxu0 %v635
    %v703 = vpop.f32.mrb[0].mxu0
    %v704 = vadd.f32 %v386, %v703
    %v705 = vpop.f32.mrb[0].mxu0
    %706 = vdwg.mxu0
    %v707 = vadd.f32 %v463, %v704
    %v708 = vsub.f32 0.0, %v707
    %v709 = vmul.f32 %v708, 1.442695
    %v710 = vpow.pop %v709
    %v711 = vadd.f32 %v710, 1.0
    %v712 = vrcp.pop %v711
    %v713 = vmul.f32 1.0, %v712
    %v714 = vlaneseq
    %v715 = vshrl.u32 %v714, 7
    %v716 = vsub.s32 0, %v715
    %v717 = vrot.slane %v713, %v716
    %719 = vbcast.lane.b32.xlu0 %v717, 256
    %v720 = vpop.permute.xlu0 %719
    %s722 = sor.u32 256, 8
    %723 = vbcast.lane.b32.xlu0 %v717, %s722
    %v724 = vpop.permute.xlu0 %723
    %s726 = sor.u32 256, 16
    %727 = vbcast.lane.b32.xlu0 %v717, %s726
    %v728 = vpop.permute.xlu0 %727
    %s730 = sor.u32 256, 24
    %731 = vbcast.lane.b32.xlu0 %v717, %s730
    %v732 = vpop.permute.xlu0 %731
    %s734 = sor.u32 256, 32
    %735 = vbcast.lane.b32.xlu0 %v717, %s734
    %v736 = vpop.permute.xlu0 %735
    %s738 = sor.u32 256, 40
    %739 = vbcast.lane.b32.xlu0 %v717, %s738
    %v740 = vpop.permute.xlu0 %739
    %s742 = sor.u32 256, 48
    %743 = vbcast.lane.b32.xlu0 %v717, %s742
    %v744 = vpop.permute.xlu0 %743
    %s746 = sor.u32 256, 56
    %747 = vbcast.lane.b32.xlu0 %v717, %s746
    %v748 = vpop.permute.xlu0 %747
    %v749 = vlaneseq
    %v750 = vshrl.u32 %v749, 7
    %v751 = vsub.s32 1, %v750
    %v752 = vrot.slane %v713, %v751
    %754 = vbcast.lane.b32.xlu0 %v752, 256
    %v755 = vpop.permute.xlu0 %754
    %s757 = sor.u32 256, 8
    %758 = vbcast.lane.b32.xlu0 %v752, %s757
    %v759 = vpop.permute.xlu0 %758
    %s761 = sor.u32 256, 16
    %762 = vbcast.lane.b32.xlu0 %v752, %s761
    %v763 = vpop.permute.xlu0 %762
    %s765 = sor.u32 256, 24
    %766 = vbcast.lane.b32.xlu0 %v752, %s765
    %v767 = vpop.permute.xlu0 %766
    %s769 = sor.u32 256, 32
    %770 = vbcast.lane.b32.xlu0 %v752, %s769
    %v771 = vpop.permute.xlu0 %770
    %s773 = sor.u32 256, 40
    %774 = vbcast.lane.b32.xlu0 %v752, %s773
    %v775 = vpop.permute.xlu0 %774
    %s777 = sor.u32 256, 48
    %778 = vbcast.lane.b32.xlu0 %v752, %s777
    %v779 = vpop.permute.xlu0 %778
    %s781 = sor.u32 256, 56
    %782 = vbcast.lane.b32.xlu0 %v752, %s781
    %v783 = vpop.permute.xlu0 %782
    %v784 = vmul.f32 %v35, %v720
    %v785 = vmul.f32 %v36, %v720
    %v786 = vmul.f32 %v37, %v724
    %v787 = vmul.f32 %v38, %v724
    %v788 = vmul.f32 %v39, %v728
    %v789 = vmul.f32 %v40, %v728
    %v790 = vmul.f32 %v41, %v732
    %v791 = vmul.f32 %v42, %v732
    %v792 = vmul.f32 %v43, %v736
    %v793 = vmul.f32 %v44, %v736
    %v794 = vmul.f32 %v45, %v740
    %v795 = vmul.f32 %v46, %v740
    %v796 = vmul.f32 %v47, %v744
    %v797 = vmul.f32 %v48, %v744
    %v798 = vmul.f32 %v49, %v748
    %v799 = vmul.f32 %v50, %v748
    %v800 = vmul.f32 %v51, %v755
    %v801 = vmul.f32 %v52, %v755
    %v802 = vmul.f32 %v53, %v759
    %v803 = vmul.f32 %v54, %v759
    %v804 = vmul.f32 %v55, %v763
    %v805 = vmul.f32 %v56, %v763
    %v806 = vmul.f32 %v57, %v767
    %v807 = vmul.f32 %v58, %v767
    %v808 = vmul.f32 %v59, %v771
    %v809 = vmul.f32 %v60, %v771
    %v810 = vmul.f32 %v61, %v775
    %v811 = vmul.f32 %v62, %v775
    %v812 = vmul.f32 %v63, %v779
    %v813 = vmul.f32 %v64, %v779
    %v814 = vmul.f32 %v65, %v783
    %v815 = vmul.f32 %v66, %v783
    %816 = vst [vmem:[#allocation5] sm:$0xff] %v784
    %817 = vst [vmem:[#allocation5 + $0x8] sm:$0xff] %v785
    %818 = vst [vmem:[#allocation5 + $0x10] sm:$0xff] %v786
    %819 = vst [vmem:[#allocation5 + $0x18] sm:$0xff] %v787
    %820 = vst [vmem:[#allocation5 + $0x20] sm:$0xff] %v788
    %821 = vst [vmem:[#allocation5 + $0x28] sm:$0xff] %v789
    %822 = vst [vmem:[#allocation5 + $0x30] sm:$0xff] %v790
    %823 = vst [vmem:[#allocation5 + $0x38] sm:$0xff] %v791
    %824 = vst [vmem:[#allocation5 + $0x40] sm:$0xff] %v792
    %825 = vst [vmem:[#allocation5 + $0x48] sm:$0xff] %v793
    %826 = vst [vmem:[#allocation5 + $0x50] sm:$0xff] %v794
    %827 = vst [vmem:[#allocation5 + $0x58] sm:$0xff] %v795
    %828 = vst [vmem:[#allocation5 + $0x60] sm:$0xff] %v796
    %829 = vst [vmem:[#allocation5 + $0x68] sm:$0xff] %v797
    %830 = vst [vmem:[#allocation5 + $0x70] sm:$0xff] %v798
    %831 = vst [vmem:[#allocation5 + $0x78] sm:$0xff] %v799
    %832 = vst [vmem:[#allocation5 + $0x80] sm:$0xff] %v800
    %833 = vst [vmem:[#allocation5 + $0x88] sm:$0xff] %v801
    %834 = vst [vmem:[#allocation5 + $0x90] sm:$0xff] %v802
    %835 = vst [vmem:[#allocation5 + $0x98] sm:$0xff] %v803
    %836 = vst [vmem:[#allocation5 + $0xa0] sm:$0xff] %v804
    %837 = vst [vmem:[#allocation5 + $0xa8] sm:$0xff] %v805
    %838 = vst [vmem:[#allocation5 + $0xb0] sm:$0xff] %v806
    %839 = vst [vmem:[#allocation5 + $0xb8] sm:$0xff] %v807
    %840 = vst [vmem:[#allocation5 + $0xc0] sm:$0xff] %v808
    %841 = vst [vmem:[#allocation5 + $0xc8] sm:$0xff] %v809
    %842 = vst [vmem:[#allocation5 + $0xd0] sm:$0xff] %v810
    %843 = vst [vmem:[#allocation5 + $0xd8] sm:$0xff] %v811
    %844 = vst [vmem:[#allocation5 + $0xe0] sm:$0xff] %v812
    %845 = vst [vmem:[#allocation5 + $0xe8] sm:$0xff] %v813
    %846 = vst [vmem:[#allocation5 + $0xf0] sm:$0xff] %v814
    %847 = vst [vmem:[#allocation5 + $0xf8] sm:$0xff] %v815
    // Predicated region
    $region26: #{tpu_custom_call.1} parent=1 // pred_check
      _
    $region27: #{tpu_custom_call.1} parent=1 // pred_check_branch
      %849 = sbr.rel (0) target = $region29
    $region28: #{tpu_custom_call.1} parent=1 // pred_region
      %s851 = ssub.s32 4096, 4096
      %852 = vsyncadd [#allocation4], %s851
      %s853 = sshll.u32 [#allocation5], 4
      %s854 = int_to_ptr.vmem [resolvable:$true] %s853
      %859 = dma.vmem_to_hbm [thread:$0]  %s854, 4096, %s5, [#allocation4], 256, 256, 16
    $region29: #{tpu_custom_call.1} parent=1 // pred_fallthru
      _
    // Predicated region
    $region30: #{tpu_custom_call.1} parent=1 // pred_check
      _
    $region31: #{tpu_custom_call.1} parent=1 // pred_check_branch
      %861 = sbr.rel (0) target = $region33
    $region32: #{tpu_custom_call.1} parent=1 // pred_region
      %862 = dma.done [#allocation4], 4096
    $region33: #{tpu_custom_call.1} parent=1 // pred_fallthru
      _
    %863 = vsyncpa [#allocation3], 1
    %864 = vsyncpa [#allocation4], 1

</llo_original>
